<compile_context>
chip_gen: v6e
topology: v6e:2x2x1
jax: 0.10.0
libtpu: 0.0.40
codegen_flags: <defaults>
</compile_context>

<pallas_src>
import jax
import jax.numpy as jnp
from jax.experimental import pallas as pl
from jax.experimental.pallas import tpu as pltpu

_VMEM_BUDGET = 16 * 1024 * 1024  # per-step tile budget; safe on v5e/v6e/v7x


# ----------------------------------------------------------------------------
# Kernels
# ----------------------------------------------------------------------------
def _conv_kernel(x_ref, w_ref, b_ref, o_ref):
    """One (batch, length-tile) step of the fused im2col conv.

    x_ref: (1, 3C, TL)   stacked taps [x[2t-1]; x[2t]; x[2t+1]]
    w_ref: (C, 3C)       weight with tap folded into the contraction dim
    b_ref: (C, 1)        bias
    o_ref: (1, C, TL)    output tile
    """
    acc = jnp.dot(w_ref[...], x_ref[0], preferred_element_type=jnp.float32)
    o_ref[0] = (acc + b_ref[...]).astype(o_ref.dtype)


def _avg_pool_kernel(xe_ref, xo_ref, o_ref):
    """avg_pool1d(kernel=2, stride=2): mean of pre-split even/odd phases.

    xe_ref, xo_ref, o_ref: (1, C, TL)
    """
    s = xe_ref[0].astype(jnp.float32) + xo_ref[0].astype(jnp.float32)
    o_ref[0] = (s * 0.5).astype(o_ref.dtype)


# ----------------------------------------------------------------------------
# Tile selection (keeps double-buffered tiles + resident weight under budget)
# ----------------------------------------------------------------------------
def _pick_l_tile(l_out, per_elem_bytes, fixed_bytes=0):
    avail = max(_VMEM_BUDGET - fixed_bytes, 4 * 1024 * 1024)
    t_max = avail // max(per_elem_bytes, 1)
    if l_out <= t_max:
        return int(l_out)                         # full length: no 128 constraint
    return int(max(128, min((t_max // 128) * 128, 4096)))


# ----------------------------------------------------------------------------
# Wrapper
# ----------------------------------------------------------------------------
def downsample(x, weight=None, bias=None, with_conv=True):
    """x: (B, C, L) float32. Returns (B, C, L_out)."""
    b, c, l = x.shape
    if with_conv:
        l_out = (l - 1) // 2 + 1

        # Even/odd phase split + zero boundaries (one fused XLA pass). Replaces
        # the full-tensor jnp.pad and all in-kernel stride-2 lane slices.
        xe = x[:, :, 0::2]                                     # x[2t]    (B,C,l_out)
        xo = x[:, :, 1::2]                                     # x[2t+1]  (B,C,l//2)
        pad_r = l_out - xo.shape[-1]
        xo_r = xo if pad_r == 0 else jnp.pad(xo, ((0, 0), (0, 0), (0, pad_r)))
        xo_l = jnp.pad(xo, ((0, 0), (0, 0), (1, 0)))[:, :, :l_out]   # x[2t-1]
        x_taps = jnp.concatenate([xo_l, xe, xo_r], axis=1)     # (B, 3C, l_out)

        # weight (C_out, C_in, 3) -> (C_out, 3*C_in): tap folded into contraction,
        # matching the [k=0 | k=1 | k=2] channel stacking of x_taps.
        w2d = jnp.transpose(weight, (0, 2, 1)).reshape(c, 3 * c)
        bias_col = bias.reshape(c, 1)

        fixed = 2 * (w2d.size + bias_col.size) * 4             # (double-buffered) params
        per_elem = (2 * 3 * c + 2 * c) * 4                     # dbl-buffered in + out tile
        tl = _pick_l_tile(l_out, per_elem, fixed)
        grid = (b, pl.cdiv(l_out, tl))

        return pl.pallas_call(
            _conv_kernel,
            out_shape=jax.ShapeDtypeStruct((b, c, l_out), x.dtype),
            grid_spec=pltpu.PrefetchScalarGridSpec(
                num_scalar_prefetch=0,
                grid=grid,
                in_specs=[
                    pl.BlockSpec((1, 3 * c, tl), lambda i, t: (i, 0, t)),
                    pl.BlockSpec((c, 3 * c), lambda i, t: (0, 0)),   # constant: fetched once
                    pl.BlockSpec((c, 1), lambda i, t: (0, 0)),
                ],
                out_specs=pl.BlockSpec((1, c, tl), lambda i, t: (i, 0, t)),
            ),
            compiler_params=pltpu.CompilerParams(
                dimension_semantics=("parallel", "parallel"),
                vmem_limit_bytes=32 * 1024 * 1024,
            ),
        )(x_taps, w2d, bias_col)
    else:
        l_out = l // 2
        xe = x[:, :, 0:2 * l_out:2]
        xo = x[:, :, 1:2 * l_out:2]
        per_elem = (2 * c + 2 * c + 2 * c) * 4                 # two inputs + output, dbl-buffered
        tl = _pick_l_tile(l_out, per_elem, 0)
        grid = (b, pl.cdiv(l_out, tl))

        return pl.pallas_call(
            _avg_pool_kernel,
            out_shape=jax.ShapeDtypeStruct((b, c, l_out), x.dtype),
            grid_spec=pltpu.PrefetchScalarGridSpec(
                num_scalar_prefetch=0,
                grid=grid,
                in_specs=[
                    pl.BlockSpec((1, c, tl), lambda i, t: (i, 0, t)),
                    pl.BlockSpec((1, c, tl), lambda i, t: (i, 0, t)),
                ],
                out_specs=pl.BlockSpec((1, c, tl), lambda i, t: (i, 0, t)),
            ),
            compiler_params=pltpu.CompilerParams(
                dimension_semantics=("parallel", "parallel"),
                vmem_limit_bytes=32 * 1024 * 1024,
            ),
        )(xe, xo)


# ----------------------------------------------------------------------------
# Reference (plain JAX) for verification
# ----------------------------------------------------------------------------
def _ref_downsample(x, weight, bias, with_conv=True):
    if with_conv:
        x_pad = jnp.pad(x, ((0, 0), (0, 0), (1, 1)))
        out = jax.lax.conv_general_dilated(
            x_pad, weight, window_strides=(2,), padding="VALID",
            dimension_numbers=("NCH", "OIH", "NCH"))
        return out + bias.reshape(1, -1, 1)
    else:
        l_out = x.shape[-1] // 2
        xr = x[:, :, : 2 * l_out].reshape(x.shape[0], x.shape[1], l_out, 2)
        return xr.mean(-1)


if __name__ == "__main__":
    key = jax.random.PRNGKey(0)
    k_x, k_w, k_b = jax.random.split(key, 3)

    B, C, L = 2, 4, 16
    x = jax.random.normal(k_x, (B, C, L), dtype=jnp.float32)

    # Conv1d(C, C, 3) parameter shapes: weight (C, C, 3), bias (C,)
    fan_in = C * 3
    bound = 1.0 / (fan_in ** 0.5)
    weight = jax.random.uniform(k_w, (C, C, 3), jnp.float32, -bound, bound)
    bias = jax.random.uniform(k_b, (C,), jnp.float32, -bound, bound)

    # with_conv=True path
    out_conv = downsample(x, weight, bias, with_conv=True)
    jax.block_until_ready(out_conv)
    ref_conv = _ref_downsample(x, weight, bias, with_conv=True)
    assert out_conv.shape == (B, C, (L - 1) // 2 + 1)
    assert jnp.allclose(out_conv, ref_conv, atol=1e-5, rtol=1e-5)

    # odd length exercises the zero-boundary taps
    x_odd = jax.random.normal(k_x, (B, C, L + 1), dtype=jnp.float32)
    out_conv_odd = downsample(x_odd, weight, bias, with_conv=True)
    jax.block_until_ready(out_conv_odd)
    ref_conv_odd = _ref_downsample(x_odd, weight, bias, with_conv=True)
    assert out_conv_odd.shape == ref_conv_odd.shape
    assert jnp.allclose(out_conv_odd, ref_conv_odd, atol=1e-5, rtol=1e-5)

    # with_conv=False path (avg_pool1d)
    out_pool = downsample(x, with_conv=False)
    jax.block_until_ready(out_pool)
    ref_pool = _ref_downsample(x, weight, bias, with_conv=False)
    assert out_pool.shape == (B, C, L // 2)
    assert jnp.allclose(out_pool, ref_pool, atol=1e-5, rtol=1e-5)

    print("KERNEL_OK")
</pallas_src>

<mosaic_0001>
module attributes {stable_mosaic.version = 11 : i64} {
  func.func @_conv_kernel(%arg0: i32, %arg1: i32, %arg2: memref<1x12x8xf32, #tpu.memory_space<vmem>>, %arg3: memref<4x12xf32, #tpu.memory_space<vmem>>, %arg4: memref<4x1xf32, #tpu.memory_space<vmem>>, %arg5: memref<1x4x8xf32, #tpu.memory_space<vmem>>) attributes {dimension_semantics = [#tpu.dimension_semantics<parallel>, #tpu.dimension_semantics<parallel>], iteration_bounds = array<i64: 2, 1>, scalar_prefetch = 0 : i64, scratch_operands = 0 : i64, tpu.core_type = #tpu.core_type<tc>, window_params = [{transform_indices = @transform_0, window_bounds = array<i64: 1, 12, 8>}, {pipeline_mode = #tpu.pipeline_mode<synchronous>, transform_indices = @transform_1, window_bounds = array<i64: 4, 12>}, {pipeline_mode = #tpu.pipeline_mode<synchronous>, transform_indices = @transform_2, window_bounds = array<i64: 4, 1>}, {transform_indices = @transform_3, window_bounds = array<i64: 1, 4, 8>}]} {
    %c0 = arith.constant 0 : index
    %c0_0 = arith.constant 0 : index
    %0 = vector.load %arg3[%c0, %c0_0] : memref<4x12xf32, #tpu.memory_space<vmem>>, vector<4x12xf32>
    %c0_1 = arith.constant 0 : index
    %c0_2 = arith.constant 0 : index
    %c0_3 = arith.constant 0 : index
    %1 = vector.load %arg2[%c0_1, %c0_2, %c0_3] : memref<1x12x8xf32, #tpu.memory_space<vmem>>, vector<1x12x8xf32>
    %2 = vector.shape_cast %1 : vector<1x12x8xf32> to vector<12x8xf32>
    %cst = arith.constant dense<0.000000e+00> : vector<4x8xf32>
    %3 = tpu.matmul %0, %2, %cst {dimension_numbers = #tpu.dot_dimension_numbers<[1], [0], [0], [1], [0, 0, 1, 1], [], []>} : vector<4x12xf32>, vector<12x8xf32>, vector<4x8xf32> -> vector<4x8xf32>
    %c0_4 = arith.constant 0 : index
    %c0_5 = arith.constant 0 : index
    %4 = vector.load %arg4[%c0_4, %c0_5] : memref<4x1xf32, #tpu.memory_space<vmem>>, vector<4x1xf32>
    %5 = vector.broadcast %4 : vector<4x1xf32> to vector<4x8xf32>
    %6 = arith.addf %3, %5 : vector<4x8xf32>
    %c0_6 = arith.constant 0 : index
    %c0_7 = arith.constant 0 : index
    %c0_8 = arith.constant 0 : index
    %7 = vector.load %arg5[%c0_6, %c0_7, %c0_8] : memref<1x4x8xf32, #tpu.memory_space<vmem>>, vector<1x4x8xf32>
    %8 = vector.shape_cast %7 : vector<1x4x8xf32> to vector<4x8xf32>
    %9 = vector.shape_cast %6 : vector<4x8xf32> to vector<1x4x8xf32>
    tpu.vector_store %arg5[%c0_6, %c0_7, %c0_8], %9 {strides = array<i32>} : memref<1x4x8xf32, #tpu.memory_space<vmem>>, vector<1x4x8xf32>,
    return
  }
  func.func @transform_0(%arg0: i32, %arg1: i32) -> (i32, i32, i32) {
    %c0_i32 = arith.constant 0 : i32
    %c0_i32_0 = arith.constant 0 : i32
    return %arg0, %c0_i32, %arg1 : i32, i32, i32
  }
  func.func @transform_1(%arg0: i32, %arg1: i32) -> (i32, i32) {
    %c0_i32 = arith.constant 0 : i32
    %c0_i32_0 = arith.constant 0 : i32
    %c0_i32_1 = arith.constant 0 : i32
    return %c0_i32, %c0_i32_0 : i32, i32
  }
  func.func @transform_2(%arg0: i32, %arg1: i32) -> (i32, i32) {
    %c0_i32 = arith.constant 0 : i32
    %c0_i32_0 = arith.constant 0 : i32
    %c0_i32_1 = arith.constant 0 : i32
    return %c0_i32, %c0_i32_0 : i32, i32
  }
  func.func @transform_3(%arg0: i32, %arg1: i32) -> (i32, i32, i32) {
    %c0_i32 = arith.constant 0 : i32
    %c0_i32_0 = arith.constant 0 : i32
    return %arg0, %c0_i32, %arg1 : i32, i32, i32
  }
}

</mosaic_0001>

<llo_original>
// kernel: tpu_custom_call.1
$region0: #{tpu_custom_call.1}
  #allocation0 [shape = 'u32[]', space=smem, size = 0x4, offset = 0x4, fixed_abs, tag = 'smem constant byte address 0x4 - core index']
  #allocation1 [shape = 'u32[144,128]{1,0:T(1,128)}', space=vmem, size = 0x12000, scoped, tag = 'internal scratch']
  %s0 = inlined_call_operand.vmem [shape: f32[2,12,8], index: 0, kind: input, shape index: {}]
  %s1 = inlined_call_operand.vmem [shape: f32[4,12], index: 1, kind: input, shape index: {}]
  %s2 = inlined_call_operand.vmem [shape: f32[4,1], index: 2, kind: input, shape index: {}]
  %s3 = inlined_call_operand.hbm [shape: f32[2,4,8], index: 3, kind: output, shape index: {}]
  %s4 = sld [smem:[#allocation0]]
  $region45: #{tpu_custom_call.1} parent=0
    _
  %s6 = ssub.s32 1, %s4
  %s7 = scalar_select 0, %s6, %s4
  $region1: #{tpu_custom_call.1} parent=0
    #allocation2 [shape = 'u8[4096]{0}', space=vmem, size = 0x1000, scoped, tag = 'output window, operand 0']
    #allocation3 [shape = 's32[2]{0}', space=sflag, size = 0x8, scoped, tag = 'scoped memory for tpu_custom_call.1']
    %8 = vsyncpa [#allocation3], 0
    %s9 = scalar_lea.sflag [#allocation3], 1
    %10 = vsyncpa %s9, 0
    loop: start=0, step=1, limit=4
    $region2: #{tpu_custom_call.1} parent=1 // loop_pre_header
      _
    $region3: #{tpu_custom_call.1} parent=1 // loop_header
      %s12 = sphi 0, %s16
      %p13 = scmp.ge.s32.totalorder %s12, 4
      %s19 = sphi 0, %s31
      %s20 = sphi 0, %s27
      %s21 = sphi 0, %s19
      %s22 = sphi 0, %s20
      %s23 = sphi 0, %s21
      %s24 = sphi 0, %s22
      %s36 = sphi 0, %s38
      %s39 = sphi 0, %s36
      %s40 = sphi 0, %s39
      %s56 = sphi 0, %s40
      %s60 = sphi 0, %s60
      %s62 = sphi 0, %s60
      %s63 = sphi 0, %s62
      %s77 = sphi 0, %s63
      %s81 = sphi 0, %s81
      %s83 = sphi 0, %s81
      %s84 = sphi 0, %s83
      %s98 = sphi 0, %s84
      %s106 = sphi 0, %s108
      %s109 = sphi 0, %s106
      %s110 = sphi 0, %s109
      %s126 = sphi 0, %s110
    $region4: #{tpu_custom_call.1} parent=1 // loop_header_branch
      %15 = sbr.rel (%p13) target = $region8
    $region5: #{tpu_custom_call.1} parent=1 // loop_body
      %s17 = ssub.s32 %s12, 1
      %s18 = ssub.s32 %s12, 2
      %s25 = sadd.s32 1, %s20
      %p26 = scmp.ge.s32.totalorder %s25, 1
      %s27 = scalar_select %p26, 0, %s25
      %s28 = sadd.s32 1, %s19
      %s29 = scalar_select %p26, %s28, %s19
      %p30 = scmp.ge.s32.totalorder %s29, 2
      %s31 = scalar_select %p30, 0, %s29
      %s32 = ssub.s32 %s19, %s31
      %s33 = ssub.s32 %s20, %s27
      %s34 = sor.u32 %s32, %s33
      %p35 = scmp.eq.s32.totalorder %s34, 0
      %s37 = sadd.s32 %s36, 1
      %s38 = scalar_select %p35, %s36, %s37
      %p41 = pneg %p35
      %p42 = scmp.eq.s32.totalorder %s12, 1
      %p43 = por %p41, %p42
      %p44 = scmp.ne.s32.totalorder %s36, %s39
      %p45 = scmp.eq.s32.totalorder %s12, 0
      %p46 = por %p44, %p45
      %p47 = scmp.ne.s32.totalorder %s36, %s39
      %p48 = scmp.eq.s32.totalorder %s17, 1
      %p49 = por %p47, %p48
      %p50 = scmp.ne.s32.totalorder %s39, %s40
      %p51 = scmp.eq.s32.totalorder %s17, 0
      %p52 = por %p50, %p51
      %p53 = scmp.ne.s32.totalorder %s39, %s40
      %p54 = scmp.eq.s32.totalorder %s18, 1
      %p55 = por %p53, %p54
      %p57 = scmp.ne.s32.totalorder %s40, %s56
      %p58 = scmp.eq.s32.totalorder %s18, 0
      %p59 = por %p57, %p58
      %s61 = sadd.s32 %s60, 1
      %p64 = scmp.eq.s32.totalorder %s12, 1
      %p65 = scmp.ne.s32.totalorder %s60, %s62
      %p66 = scmp.eq.s32.totalorder %s12, 0
      %p67 = por %p65, %p66
      %p68 = scmp.ne.s32.totalorder %s60, %s62
      %p69 = scmp.eq.s32.totalorder %s17, 1
      %p70 = por %p68, %p69
      %p71 = scmp.ne.s32.totalorder %s62, %s63
      %p72 = scmp.eq.s32.totalorder %s17, 0
      %p73 = por %p71, %p72
      %p74 = scmp.ne.s32.totalorder %s62, %s63
      %p75 = scmp.eq.s32.totalorder %s18, 1
      %p76 = por %p74, %p75
      %p78 = scmp.ne.s32.totalorder %s63, %s77
      %p79 = scmp.eq.s32.totalorder %s18, 0
      %p80 = por %p78, %p79
      %s82 = sadd.s32 %s81, 1
      %p85 = scmp.eq.s32.totalorder %s12, 1
      %p86 = scmp.ne.s32.totalorder %s81, %s83
      %p87 = scmp.eq.s32.totalorder %s12, 0
      %p88 = por %p86, %p87
      %p89 = scmp.ne.s32.totalorder %s81, %s83
      %p90 = scmp.eq.s32.totalorder %s17, 1
      %p91 = por %p89, %p90
      %p92 = scmp.ne.s32.totalorder %s83, %s84
      %p93 = scmp.eq.s32.totalorder %s17, 0
      %p94 = por %p92, %p93
      %p95 = scmp.ne.s32.totalorder %s83, %s84
      %p96 = scmp.eq.s32.totalorder %s18, 1
      %p97 = por %p95, %p96
      %p99 = scmp.ne.s32.totalorder %s84, %s98
      %p100 = scmp.eq.s32.totalorder %s18, 0
      %p101 = por %p99, %p100
      %s102 = ssub.s32 %s19, %s31
      %s103 = ssub.s32 %s20, %s27
      %s104 = sor.u32 %s102, %s103
      %p105 = scmp.eq.s32.totalorder %s104, 0
      %s107 = sadd.s32 %s106, 1
      %s108 = scalar_select %p105, %s106, %s107
      %p111 = pneg %p105
      %p112 = scmp.eq.s32.totalorder %s12, 1
      %p113 = por %p111, %p112
      %p114 = scmp.ne.s32.totalorder %s106, %s109
      %p115 = scmp.eq.s32.totalorder %s12, 0
      %p116 = por %p114, %p115
      %p117 = scmp.ne.s32.totalorder %s106, %s109
      %p118 = scmp.eq.s32.totalorder %s17, 1
      %p119 = por %p117, %p118
      %p120 = scmp.ne.s32.totalorder %s109, %s110
      %p121 = scmp.eq.s32.totalorder %s17, 0
      %p122 = por %p120, %p121
      %p123 = scmp.ne.s32.totalorder %s109, %s110
      %p124 = scmp.eq.s32.totalorder %s18, 1
      %p125 = por %p123, %p124
      %p127 = scmp.ne.s32.totalorder %s110, %s126
      %p128 = scmp.eq.s32.totalorder %s18, 0
      %p129 = por %p127, %p128
      %p130 = scmp.le.s32.totalorder 1, %s12
      %p131 = scmp.lt.s32.totalorder %s12, 3
      %p132 = pnand %p130, %p131
      %p133 = pneg %p132
      // Predicated region
      $region9: #{tpu_custom_call.1} parent=5 // pred_check
        _
      $region10: #{tpu_custom_call.1} parent=5 // pred_check_branch
        %135 = sbr.rel (%p132) target = $region12
      $region11: #{tpu_custom_call.1} parent=5 // pred_region
        %s136 = ssub.s32 %s12, 1
        // Predicated region
        $region13: #{tpu_custom_call.1} parent=11 // pred_check
          %p137 = pneg %p73
        $region14: #{tpu_custom_call.1} parent=11 // pred_check_branch
          %139 = sbr.rel (%p137) target = $region16
        $region15: #{tpu_custom_call.1} parent=11 // pred_region
          _
        $region16: #{tpu_custom_call.1} parent=11 // pred_fallthru
          _
        // Predicated region
        $region17: #{tpu_custom_call.1} parent=11 // pred_check
          %p140 = pneg %p94
        $region18: #{tpu_custom_call.1} parent=11 // pred_check_branch
          %142 = sbr.rel (%p140) target = $region20
        $region19: #{tpu_custom_call.1} parent=11 // pred_region
          _
        $region20: #{tpu_custom_call.1} parent=11 // pred_fallthru
          _
      $region12: #{tpu_custom_call.1} parent=5 // pred_fallthru
        _
      %p143 = scmp.lt.s32.totalorder %s12, 2
      // Predicated region
      $region21: #{tpu_custom_call.1} parent=5 // pred_check
        %p144 = pneg %p143
      $region22: #{tpu_custom_call.1} parent=5 // pred_check_branch
        %146 = sbr.rel (%p144) target = $region24
      $region23: #{tpu_custom_call.1} parent=5 // pred_region
        // Predicated region
        $region25: #{tpu_custom_call.1} parent=23 // pred_check
          %p147 = pneg %p46
        $region26: #{tpu_custom_call.1} parent=23 // pred_check_branch
          %149 = sbr.rel (%p147) target = $region28
        $region27: #{tpu_custom_call.1} parent=23 // pred_region
          %p150 = scmp.lt.s32.totalorder %s19, 1
          %s151 = scalar_select %p150, %s19, 1
          %p152 = scmp.lt.s32.totalorder %s20, 0
          %s153 = scalar_select %p152, %s20, 0
          %s154 = smul.addr %s151, 2
          %s155 = sadd.s32 %s153, %s154
          %s156 = smul.addr %s155, 8
          %s157 = scalar_lea.vmem %s0, %s156
        $region28: #{tpu_custom_call.1} parent=23 // pred_fallthru
          _
      $region24: #{tpu_custom_call.1} parent=5 // pred_fallthru
        _
      %p158 = scmp.le.s32.totalorder 1, %s12
      %p159 = scmp.lt.s32.totalorder %s12, 3
      %p160 = pnand %p158, %p159
      %p161 = pneg %p160
      // Predicated region
      $region29: #{tpu_custom_call.1} parent=5 // pred_check
        _
      $region30: #{tpu_custom_call.1} parent=5 // pred_check_branch
        %163 = sbr.rel (%p160) target = $region32
      $region31: #{tpu_custom_call.1} parent=5 // pred_region
        %s164 = ssub.s32 %s12, 1
        %p165 = scmp.lt.s32.totalorder %s21, 1
        %s166 = scalar_select %p165, %s21, 1
        %p167 = scmp.lt.s32.totalorder %s22, 0
        %s168 = scalar_select %p167, %s22, 0
        %s169 = smul.addr %s166, 2
        %s170 = sadd.s32 %s168, %s169
        %s171 = smul.addr %s170, 8
        %s172 = scalar_lea.vmem %s0, %s171
        %p173 = pneg %p52
        %p174 = pneg %p49
        %p175 = pneg %p73
        %p176 = pneg %p70
        %p177 = pneg %p94
        %p178 = pneg %p91
        %p179 = pneg %p122
        %p180 = pneg %p119
        %s181 = sand.u32 %s109, 1
        %s182 = scalar_lea.sflag [#allocation3], %s181
        %s183 = sand.u32 %s109, 1
        %s184 = smul.addr %s183, 4
        %s185 = scalar_lea.vmem [#allocation2], %s184
        %p186 = scmp.lt.s32.totalorder %s21, 1
        %s187 = scalar_select %p186, %s21, 1
        %p188 = scmp.lt.s32.totalorder %s22, 0
        %s189 = scalar_select %p188, %s22, 0
        %s190 = smul.addr %s187, 2
        %s191 = sadd.s32 %s189, %s190
        %s192 = smul.addr %s191, 8
        %s193 = scalar_lea.vmem %s0, %s192
        %v194 = vld [vmem:[%s1] sm:$0xf]
        %v195 = vld [vmem:[%s193] sm:$0xff]
        %v196 = vld [vmem:[%s193 + $0x8] sm:$0xf]
        %v197 = vld [vmem:[%s2] sm:$0xf]
        %199 = vset.pattern.permute.xlu0 0
        %200 = vperm.xlu0 %199, %v197
        %v201 = vpop.permute.xlu0 %200
        %vm203 = vcmask 97280
        %v205 = vsel %vm203, %v194, 0
        %vm207 = vcmask 1043456
        %v209 = vsel %vm207, %v196, 0
        %211 = vmatprep.subr.mxu0 0.0
        %212 = vmatpush1.msra.mxu0 0.0
        %213 = vmatprep.subr.mxu0 0.0
        %214 = vmatpush1.msra.mxu0 0.0
        %215 = vmatprep.subr.mxu0 0.0
        %216 = vmatpush1.msra.mxu0 0.0
        %217 = vmatprep.subr.mxu0 0.0
        %218 = vmatpush1.msra.mxu0 0.0
        %219 = vmatprep.subr.mxu0 0.0
        %220 = vmatpush1.msra.mxu0 0.0
        %221 = vmatprep.subr.mxu0 0.0
        %222 = vmatpush1.msra.mxu0 0.0
        %223 = vmatprep.subr.mxu0 0.0
        %224 = vmatpush1.msra.mxu0 0.0
        %225 = vmatprep.subr.mxu0 0.0
        %226 = vmatpush1.msra.mxu0 0.0
        %227 = vmatprep.subr.mxu0 0.0
        %228 = vmatpush1.msra.mxu0 0.0
        %229 = vmatprep.subr.mxu0 0.0
        %230 = vmatpush1.msra.mxu0 0.0
        %231 = vmatprep.subr.mxu0 0.0
        %232 = vmatpush1.msra.mxu0 0.0
        %233 = vmatprep.subr.mxu0 0.0
        %234 = vmatpush1.msra.mxu0 0.0
        %235 = vmatprep.subr.mxu0 0.0
        %236 = vmatpush1.msra.mxu0 0.0
        %237 = vmatprep.subr.mxu0 0.0
        %238 = vmatpush1.msra.mxu0 0.0
        %239 = vmatprep.subr.mxu0 0.0
        %240 = vmatpush1.msra.mxu0 %v209
        %241 = vmatprep.subr.mxu0 0.0
        %242 = vmatpush1.msra.mxu0 %v195
        %243 = vmatprep.subr.mxu0 0.0
        %244 = vmatpush2.msra.mxu0 0.0
        %245 = vmatprep.subr.mxu0 0.0
        %246 = vmatpush2.msra.mxu0 0.0
        %247 = vmatprep.subr.mxu0 0.0
        %248 = vmatpush2.msra.mxu0 0.0
        %249 = vmatprep.subr.mxu0 0.0
        %250 = vmatpush2.msra.mxu0 0.0
        %251 = vmatprep.subr.mxu0 0.0
        %252 = vmatpush2.msra.mxu0 0.0
        %253 = vmatprep.subr.mxu0 0.0
        %254 = vmatpush2.msra.mxu0 0.0
        %255 = vmatprep.subr.mxu0 0.0
        %256 = vmatpush2.msra.mxu0 0.0
        %257 = vmatprep.subr.mxu0 0.0
        %258 = vmatpush2.msra.mxu0 0.0
        %259 = vmatprep.subr.mxu0 0.0
        %260 = vmatpush2.msra.mxu0 0.0
        %261 = vmatprep.subr.mxu0 0.0
        %262 = vmatpush2.msra.mxu0 0.0
        %263 = vmatprep.subr.mxu0 0.0
        %264 = vmatpush2.msra.mxu0 0.0
        %265 = vmatprep.subr.mxu0 0.0
        %266 = vmatpush2.msra.mxu0 0.0
        %267 = vmatprep.subr.mxu0 0.0
        %268 = vmatpush2.msra.mxu0 0.0
        %269 = vmatprep.subr.mxu0 0.0
        %270 = vmatpush2.msra.mxu0 0.0
        %271 = vmatprep.subr.mxu0 0.0
        %272 = vmatpush2.msra.mxu0 0.0
        %273 = vmatprep.subr.mxu0 0.0
        %274 = vmatpush2.msra.mxu0 0.0
        %275 = vmatprep.mubr.f32.mxu0 0.0
        %276 = vmatmul.mubr.f32.gmra.mxu0 %v205
        %v277 = vpop.f32.mrf.mxu0
        %v278 = vadd.f32 %v201, %v277
        %v279 = vpop.f32.mrf.mxu0
        %280 = vdwg.mxu0
        %vm281 = vcmask 60416
        %282 = vst.msk [vmem:[%s185] sm:$0xf] %vm281, %v278
        %s283 = sand.u32 %s109, 1
        %s284 = scalar_lea.sflag [#allocation3], %s283
        %s285 = sand.u32 %s109, 1
        %s286 = smul.addr %s285, 4
        %s287 = scalar_lea.vmem [#allocation2], %s286
        // Predicated region
        $region33: #{tpu_custom_call.1} parent=31 // pred_check
          %p288 = pneg %p119
        $region34: #{tpu_custom_call.1} parent=31 // pred_check_branch
          %290 = sbr.rel (%p288) target = $region36
        $region35: #{tpu_custom_call.1} parent=31 // pred_region
          %s292 = ssub.s32 64, 64
          %293 = vsyncadd %s284, %s292
          %s294 = sadd.s32 %s22, %s21
          %s295 = smul.addr %s294, 64
          %s296 = scalar_lea.hbm %s3, %s295
          %s298 = sshll.u32 %s287, 4
          %s299 = int_to_ptr.vmem [resolvable:$true] %s298
          %301 = dma.vmem_to_hbm [thread:$0]  %s299, 64, %s296, %s284
        $region36: #{tpu_custom_call.1} parent=31 // pred_fallthru
          _
      $region32: #{tpu_custom_call.1} parent=5 // pred_fallthru
        _
      %p302 = scmp.le.s32.totalorder 2, %s12
      // Predicated region
      $region37: #{tpu_custom_call.1} parent=5 // pred_check
        %p303 = pneg %p302
      $region38: #{tpu_custom_call.1} parent=5 // pred_check_branch
        %305 = sbr.rel (%p303) target = $region40
      $region39: #{tpu_custom_call.1} parent=5 // pred_region
        %s306 = ssub.s32 %s12, 2
        // Predicated region
        $region41: #{tpu_custom_call.1} parent=39 // pred_check
          %p307 = pneg %p125
        $region42: #{tpu_custom_call.1} parent=39 // pred_check_branch
          %309 = sbr.rel (%p307) target = $region44
        $region43: #{tpu_custom_call.1} parent=39 // pred_region
          %s310 = sand.u32 %s110, 1
          %s311 = scalar_lea.sflag [#allocation3], %s310
          %s312 = sand.u32 %s110, 1
          %s313 = smul.addr %s312, 4
          %s314 = scalar_lea.vmem [#allocation2], %s313
          %315 = dma.done %s311, 64
        $region44: #{tpu_custom_call.1} parent=39 // pred_fallthru
          _
      $region40: #{tpu_custom_call.1} parent=5 // pred_fallthru
        _
    $region6: #{tpu_custom_call.1} parent=1 // loop_footer
      %s16 = sadd.s32 1, %s12
    $region7: #{tpu_custom_call.1} parent=1 // loop_footer_branch
      %11 = sbr.rel target = $region3
    $region8: #{tpu_custom_call.1} parent=1 // loop_exit
      _
    %316 = vsyncpa [#allocation3], 1
    %s317 = scalar_lea.sflag [#allocation3], 1
    %318 = vsyncpa %s317, 1

</llo_original>
